<compile_context>
chip_gen: v5e
topology: v5e:2x2
jax: 0.10.0
libtpu: 0.0.40
codegen_flags: <defaults>
</compile_context>

<pallas_src>
import math

import jax
import jax.numpy as jnp
from jax.experimental import pallas as pl
from jax.experimental.pallas import tpu as pltpu


def _round_up(n, m):
    return ((n + m - 1) // m) * m


def ets_embed_kernel(x_ref, w_ref, o_ref):
    # x_ref: (TM, 3C), w_ref: (3C, TN), o_ref: (TM, TN)
    o_ref[...] = jnp.dot(
        x_ref[...], w_ref[...],
        preferred_element_type=jnp.float32).astype(o_ref.dtype)


def ets_embedding(x, weight, *, compute_dtype=None, tm=512, tn=512):
    """Causal conv embedding (eval-mode forward of ETSEmbedding).

    x:      (B, L, c_in)
    weight: (d_model, c_in, 3)  -- PyTorch Conv1d layout
    compute_dtype: None keeps x.dtype for the MXU operands; jnp.bfloat16 is
                   recommended on v6e / v7x (f32 accumulation is kept).
    """
    B, L, C = x.shape
    D = weight.shape[0]
    K = 3 * C
    M = B * L

    # --- tap-stacked input: X3[b,t,k*C+c] = x[b, t-2+k, c] -----------------
    cols = []
    for k in range(3):                      # tap k reads x[b, t-2+k, c]
        shift = 2 - k
        if shift > 0:
            xs = jnp.pad(x[:, :L - shift, :], ((0, 0), (shift, 0), (0, 0)))
        else:
            xs = x
        cols.append(xs)
    x3 = jnp.concatenate(cols, axis=-1).reshape(M, K)       # (B*L, 3C)

    # --- weight relayout: (D, C, 3) -> (3, C, D) -> (3C, D) ----------------
    w = jnp.transpose(weight, (2, 1, 0)).reshape(K, D)

    if compute_dtype is not None:
        x3 = x3.astype(compute_dtype)
        w = w.astype(compute_dtype)

    # --- tile sizes: TM multiple of 8, TN multiple of 128 (lane-dense) -----
    tn_eff = min(tn, _round_up(D, 128))
    tm_eff = min(tm, _round_up(M, 8))
    d_pad = _round_up(D, tn_eff)
    m_pad = _round_up(M, tm_eff)
    if d_pad != D:
        w = jnp.pad(w, ((0, 0), (0, d_pad - D)))
    if m_pad != M:
        x3 = jnp.pad(x3, ((0, m_pad - M), (0, 0)))

    # M-tiles innermost so the weight block stays resident across the inner loop.
    grid = (d_pad // tn_eff, m_pad // tm_eff)

    bytes_accessed = (x3.size * x3.dtype.itemsize
                      + w.size * w.dtype.itemsize
                      + m_pad * d_pad * jnp.dtype(x.dtype).itemsize)

    out = pl.pallas_call(
        ets_embed_kernel,
        out_shape=jax.ShapeDtypeStruct((m_pad, d_pad), x.dtype),
        grid_spec=pltpu.PrefetchScalarGridSpec(
            num_scalar_prefetch=0,
            grid=grid,
            in_specs=[
                pl.BlockSpec((tm_eff, K), lambda j, i: (i, 0)),
                pl.BlockSpec((K, tn_eff), lambda j, i: (0, j)),
            ],
            out_specs=pl.BlockSpec((tm_eff, tn_eff), lambda j, i: (i, j)),
        ),
        compiler_params=pltpu.CompilerParams(
            dimension_semantics=("parallel", "parallel")),
        cost_estimate=pl.CostEstimate(
            flops=2 * m_pad * K * d_pad,
            transcendentals=0,
            bytes_accessed=bytes_accessed),
    )(x3, w)

    out = out[:M, :D].reshape(B, L, D)
    # TODO(synk): training-mode dropout (p=0.1) omitted; forward matches eval mode.
    return out


def reference(x, weight):
    """Pure-JAX reference of the same causal conv."""
    B, L, C = x.shape
    x_pad = jnp.concatenate([jnp.zeros((B, 2, C), x.dtype), x], axis=1)
    out = None
    for k in range(3):
        term = jnp.einsum("blc,cd->bld",
                          x_pad[:, k:k + L, :],
                          jnp.transpose(weight[:, :, k]))
        out = term if out is None else out + term
    return out.astype(x.dtype)


if __name__ == "__main__":
    B, L, C_IN, D_MODEL = 2, 16, 4, 32

    key = jax.random.PRNGKey(0)
    kx, kw = jax.random.split(key)

    x = jax.random.normal(kx, (B, L, C_IN), dtype=jnp.float32)

    # kaiming_normal_ (fan_in, gain=sqrt(2)) on Conv1d weight (d_model, c_in, 3)
    fan_in = C_IN * 3
    std = math.sqrt(2.0 / fan_in)
    weight = std * jax.random.normal(kw, (D_MODEL, C_IN, 3), dtype=jnp.float32)

    fwd = jax.jit(ets_embedding)   # fuses the X3 construction around the kernel
    out = jax.block_until_ready(fwd(x, weight))

    ref = reference(x, weight)
    assert out.shape == (B, L, D_MODEL)
    assert jnp.allclose(out, ref, atol=1e-5, rtol=1e-5), "mismatch vs reference"

    print("KERNEL_OK")
</pallas_src>

<mosaic_0001>
module attributes {stable_mosaic.version = 11 : i64} {
  func.func @ets_embed_kernel(%arg0: i32, %arg1: i32, %arg2: memref<32x12xf32, #tpu.memory_space<vmem>>, %arg3: memref<12x128xf32, #tpu.memory_space<vmem>>, %arg4: memref<32x128xf32, #tpu.memory_space<vmem>>) attributes {dimension_semantics = [#tpu.dimension_semantics<parallel>, #tpu.dimension_semantics<parallel>], iteration_bounds = array<i64: 1, 1>, scalar_prefetch = 0 : i64, scratch_operands = 0 : i64, tpu.core_type = #tpu.core_type<tc>, window_params = [{transform_indices = @transform_0, window_bounds = array<i64: 32, 12>}, {transform_indices = @transform_1, window_bounds = array<i64: 12, 128>}, {transform_indices = @transform_2, window_bounds = array<i64: 32, 128>}]} {
    %c0 = arith.constant 0 : index
    %c0_0 = arith.constant 0 : index
    %0 = vector.load %arg2[%c0, %c0_0] : memref<32x12xf32, #tpu.memory_space<vmem>>, vector<32x12xf32>
    %c0_1 = arith.constant 0 : index
    %c0_2 = arith.constant 0 : index
    %1 = vector.load %arg3[%c0_1, %c0_2] : memref<12x128xf32, #tpu.memory_space<vmem>>, vector<12x128xf32>
    %cst = arith.constant dense<0.000000e+00> : vector<32x128xf32>
    %2 = tpu.matmul %0, %1, %cst {dimension_numbers = #tpu.dot_dimension_numbers<[1], [0], [0], [1], [0, 0, 1, 1], [], []>} : vector<32x12xf32>, vector<12x128xf32>, vector<32x128xf32> -> vector<32x128xf32>
    %c0_3 = arith.constant 0 : index
    %c0_4 = arith.constant 0 : index
    %3 = vector.load %arg4[%c0_3, %c0_4] : memref<32x128xf32, #tpu.memory_space<vmem>>, vector<32x128xf32>
    tpu.vector_store %arg4[%c0_3, %c0_4], %2 {strides = array<i32>} : memref<32x128xf32, #tpu.memory_space<vmem>>, vector<32x128xf32>,
    return
  }
  func.func @transform_0(%arg0: i32, %arg1: i32) -> (i32, i32) {
    %c0_i32 = arith.constant 0 : i32
    %c0_i32_0 = arith.constant 0 : i32
    return %arg1, %c0_i32 : i32, i32
  }
  func.func @transform_1(%arg0: i32, %arg1: i32) -> (i32, i32) {
    %c0_i32 = arith.constant 0 : i32
    %c0_i32_0 = arith.constant 0 : i32
    return %c0_i32, %arg0 : i32, i32
  }
  func.func @transform_2(%arg0: i32, %arg1: i32) -> (i32, i32) {
    %c0_i32 = arith.constant 0 : i32
    return %arg1, %arg0 : i32, i32
  }
}

</mosaic_0001>

<llo_original>
// kernel: ets_embedding.1
$region0: #{ets_embedding.1}
  #allocation0 [shape = 'u32[]', space=smem, size = 0x4, offset = 0x4, fixed_abs, tag = 'smem constant byte address 0x4 - core index']
  #allocation1 [shape = 'u32[72,128]{1,0:T(1,128)}', space=vmem, size = 0x9000, scoped, tag = 'internal scratch']
  %s0 = inlined_call_operand.vmem [shape: f32[32,12], index: 0, kind: input, shape index: {}]
  %s1 = inlined_call_operand.vmem [shape: f32[12,128], index: 1, kind: input, shape index: {}]
  %s2 = inlined_call_operand.hbm [shape: f32[32,128], index: 2, kind: output, shape index: {}]
  %s3 = sld [smem:[#allocation0]]
  $region18: #{ets_embedding.1} parent=0
    _
  %s5 = ssub.s32 1, %s3
  %s6 = scalar_select 0, %s5, %s3
  $region1: #{ets_embedding.1} parent=0
    #allocation2 [shape = 'u8[16384]{0}', space=vmem, size = 0x4000, scoped, tag = 'output window, operand 0, single buffered']
    #allocation3 [shape = 's32[1]{0}', space=sflag, size = 0x4, scoped, tag = 'scoped memory for ets_embedding.1']
    %7 = vsyncpa [#allocation3], 0
    // Predicated region
    $region2: #{ets_embedding.1} parent=1 // pred_check
      _
    $region3: #{ets_embedding.1} parent=1 // pred_check_branch
      %9 = sbr.rel (0) target = $region5
    $region4: #{ets_embedding.1} parent=1 // pred_region
      _
    $region5: #{ets_embedding.1} parent=1 // pred_fallthru
      _
    // Predicated region
    $region6: #{ets_embedding.1} parent=1 // pred_check
      _
    $region7: #{ets_embedding.1} parent=1 // pred_check_branch
      %11 = sbr.rel (0) target = $region9
    $region8: #{ets_embedding.1} parent=1 // pred_region
      _
    $region9: #{ets_embedding.1} parent=1 // pred_fallthru
      _
    %v12 = vld [vmem:[%s0] sm:$0xff]
    %v13 = vld [vmem:[%s0 + $0x8] sm:$0xff]
    %v14 = vld [vmem:[%s0 + $0x10] sm:$0xff]
    %v15 = vld [vmem:[%s0 + $0x18] sm:$0xff]
    %v16 = vld [vmem:[%s1] sm:$0xff]
    %v17 = vld [vmem:[%s1 + $0x8] sm:$0xf]
    %vm18 = vcmask 97280
    %v20 = vsel %vm18, %v12, 0
    %v23 = vsel %vm18, %v13, 0
    %v26 = vsel %vm18, %v14, 0
    %v29 = vsel %vm18, %v15, 0
    %vm31 = vcmask 1043456
    %v33 = vsel %vm31, %v17, 0
    %35 = vmatpush.msra.mxu0 0.0
    %36 = vmatpush.msra.mxu0 0.0
    %37 = vmatpush.msra.mxu0 0.0
    %38 = vmatpush.msra.mxu0 0.0
    %39 = vmatpush.msra.mxu0 0.0
    %40 = vmatpush.msra.mxu0 0.0
    %41 = vmatpush.msra.mxu0 0.0
    %42 = vmatpush.msra.mxu0 0.0
    %43 = vmatpush.msra.mxu0 0.0
    %44 = vmatpush.msra.mxu0 0.0
    %45 = vmatpush.msra.mxu0 0.0
    %46 = vmatpush.msra.mxu0 0.0
    %47 = vmatpush.msra.mxu0 0.0
    %48 = vmatpush.msra.mxu0 0.0
    %49 = vmatpush.msra.mxu0 %v33
    %50 = vmatpush.msra.mxu0 %v16
    %51 = vmatmul.f32.gmra.mxu0 %v20
    %v52 = vpop.f32.mrf.mxu0
    %v53 = vadd.f32 0.0, %v52
    %54 = vmatmul.f32.gmra.mxu0 %v23
    %v55 = vpop.f32.mrf.mxu0
    %v56 = vadd.f32 0.0, %v55
    %57 = vmatmul.f32.gmra.mxu0 %v26
    %v58 = vpop.f32.mrf.mxu0
    %v59 = vadd.f32 0.0, %v58
    %60 = vmatmul.f32.gmra.mxu0 %v29
    %v61 = vpop.f32.mrf.mxu0
    %v62 = vadd.f32 0.0, %v61
    %63 = vdwg.mxu0
    %64 = vst [vmem:[#allocation2] sm:$0xff] %v53
    %65 = vst [vmem:[#allocation2 + $0x8] sm:$0xff] %v56
    %66 = vst [vmem:[#allocation2 + $0x10] sm:$0xff] %v59
    %67 = vst [vmem:[#allocation2 + $0x18] sm:$0xff] %v62
    // Predicated region
    $region10: #{ets_embedding.1} parent=1 // pred_check
      _
    $region11: #{ets_embedding.1} parent=1 // pred_check_branch
      %69 = sbr.rel (0) target = $region13
    $region12: #{ets_embedding.1} parent=1 // pred_region
      %71 = vsyncadd [#allocation3], 0
      %s72 = sshll.u32 [#allocation2], 4
      %s73 = int_to_ptr.vmem [resolvable:$true] %s72
      %s74 = sshll.u32 %s2, 4
      %s75 = int_to_ptr.hbm [resolvable:$true] %s74
      %80 = dma.vmem_to_hbm [thread:$0]  %s73, 512, %s75, [#allocation3], 128, 128, 8
    $region13: #{ets_embedding.1} parent=1 // pred_fallthru
      _
    // Predicated region
    $region14: #{ets_embedding.1} parent=1 // pred_check
      _
    $region15: #{ets_embedding.1} parent=1 // pred_check_branch
      %82 = sbr.rel (0) target = $region17
    $region16: #{ets_embedding.1} parent=1 // pred_region
      %84 = dma.done [#allocation3], 512
    $region17: #{ets_embedding.1} parent=1 // pred_fallthru
      _
    %85 = vsyncpa [#allocation3], 1

</llo_original>
